<compile_context>
chip_gen: v5e
topology: v5e:2x2
jax: 0.10.0
libtpu: 0.0.40
codegen_flags: <defaults>
</compile_context>

<pallas_src>
import math
import functools

import jax
import jax.numpy as jnp
from jax.experimental import pallas as pl
from jax.experimental.pallas import tpu as pltpu

_EPS = 1e-5     # BatchNorm eps (PyTorch default)
_NEG = -1e30    # additive mask bias (self-loop guarantees >=1 live entry/row)


def _vmem_limit_bytes():
    # Leave headroom below the physical per-TC VMEM (64 MiB on v7x, 128 MiB on
    # v5e/v6e) for Mosaic internal scratch and double buffers.
    try:
        cap = int(pltpu.get_tpu_info().vmem_capacity_bytes)
    except Exception:
        cap = 64 << 20
    return int(max(min(cap - (16 << 20), 96 << 20), 32 << 20))


_VMEM_LIMIT = _vmem_limit_bytes()
_CP_SEQ = pltpu.CompilerParams(vmem_limit_bytes=_VMEM_LIMIT)


def _mm_t(a, b):
    """a @ b.T (contract last dims), f32 accumulation on the MXU."""
    return jax.lax.dot_general(a, b, (((1,), (1,)), ((), ())),
                               preferred_element_type=jnp.float32)


def _full_spec(shape):
    zeros = (0,) * len(shape)
    return pl.BlockSpec(shape, lambda *args, _z=zeros: _z)


# ------------------------------------------------------------------ kernels --
def _graph_kernel(w_ref, attemi_ref, attemj_ref, cos_ref, ei_ref, ej_ref):
    """cos_ji_mat = normalize-rows(W) @ normalize-rows(W).T  plus the
    batch-invariant embedding attention-score terms."""
    w = w_ref[...]
    nsq = jnp.sum(w * w, axis=-1, keepdims=True)
    wn = w * jax.lax.rsqrt(nsq + 1e-12)                 # eps guards all-zero rows
    cos_ref[...] = _mm_t(wn, wn)                        # (N, N)
    ei_ref[...] = _mm_t(w, attemi_ref[...])             # (N, H)  <emb_i, att_em_i[h]>
    ej_ref[...] = _mm_t(attemj_ref[...], w)             # (H, N)  <emb_j, att_em_j[h]>


def _attn_kernel(x_ref, linw_ref, atti_ref, attjT_ref, ei_ref, ej_ref,
                 maskb_ref, out_ref, *, heads, out_dim):
    """Fused per-batch projection + masked GAT attention (one grid step = one
    batch element).  Heads are concatenated in registers and written with a
    single lane-dense store."""
    xl = _mm_t(x_ref[...], linw_ref[...])               # (N, H*D)   one MXU pass
    # Per-head score dots as stacked matmuls against block-diagonal matrices
    # (instead of 2*H tiny M=1/N=1 matmuls).
    st = jnp.dot(xl, atti_ref[...],
                 preferred_element_type=jnp.float32) + ei_ref[...]   # (N, H)
    ss = _mm_t(attjT_ref[...], xl) + ej_ref[...]                     # (H, N)
    mb = maskb_ref[...]                                              # (N, N) additive

    outs = []
    # NOTE: heads is small (4); full unroll is fine.  For large N / many heads
    # switch to lax.fori_loop to bound vreg live ranges.
    for h in range(heads):
        lo = h * out_dim
        raw = st[:, h:h + 1] + ss[h:h + 1, :]            # (N_i, N_j)
        sc = jnp.maximum(raw, 0.2 * raw) + mb            # leaky_relu(0.2) + mask
        m = jnp.max(sc, axis=-1, keepdims=True)
        e = jnp.exp(sc - m)
        p = e * pl.reciprocal(jnp.sum(e, axis=-1, keepdims=True), approx=True)
        outs.append(jnp.dot(p, xl[:, lo:lo + out_dim],
                            preferred_element_type=jnp.float32))
    # single full-width (N, H*D) store — no per-head masked partial stores
    out_ref[...] = jnp.concatenate(outs, axis=-1)


def _tail_kernel(g_ref, ffw_ref, ffb_ref, g1_ref, b1_ref, emb_ref,
                 g2_ref, b2_ref, outw_ref, outb_ref, out_ref, *, batch, nodes):
    """Fused GNNLayer tail + GDN tail (single pass, no HBM round trip).
    BatchNorm uses batch statistics (training-mode math of the fresh module);
    two-pass variance for numerical robustness."""
    # TODO(synk): for very large B*N split into a stats pass + a row-tiled
    # normalize/matmul pass so the row axis can be pipelined / megacore-split.
    # GNNLayer: Linear(H*D -> D) (gnn_b pre-folded into ffb) + BN(D) + ReLU
    y = _mm_t(g_ref[...], ffw_ref[...]) + ffb_ref[...]               # (B*N, D)
    mean = jnp.mean(y, axis=0, keepdims=True)
    d = y - mean
    var = jnp.mean(d * d, axis=0, keepdims=True)
    y = jnp.maximum(d * jax.lax.rsqrt(var + _EPS) * g1_ref[...] + b1_ref[...], 0.0)
    # GDN tail: x * embedding — per-batch broadcast multiply in VMEM (no
    # (B*N, D) emb_rep materialization), then BN over (B, N), ReLU, OutLayer.
    emb = emb_ref[...]
    t = jnp.concatenate(
        [y[b * nodes:(b + 1) * nodes, :] * emb for b in range(batch)], axis=0)
    mean = jnp.mean(t, axis=0, keepdims=True)
    d = t - mean
    var = jnp.mean(d * d, axis=0, keepdims=True)
    t = jnp.maximum(d * jax.lax.rsqrt(var + _EPS) * g2_ref[...] + b2_ref[...], 0.0)
    # TODO(synk): nn.Dropout(0.2) has no deterministic equivalent; identity (eval mode).
    out_ref[...] = _mm_t(t, outw_ref[...]) + outb_ref[...]           # (B*N, out_win)


# --------------------------------------------------------------- wrappers ----
def learned_graph(emb, att_em_i, att_em_j):
    N, D = emb.shape
    H = att_em_i.shape[0]
    return pl.pallas_call(
        _graph_kernel,
        out_shape=(jax.ShapeDtypeStruct((N, N), jnp.float32),
                   jax.ShapeDtypeStruct((N, H), jnp.float32),
                   jax.ShapeDtypeStruct((H, N), jnp.float32)),
        grid=(1,),
        in_specs=[_full_spec((N, D)), _full_spec((H, D)), _full_spec((H, D))],
        out_specs=(_full_spec((N, N)), _full_spec((N, H)), _full_spec((H, N))),
        compiler_params=_CP_SEQ,
    )(emb, att_em_i, att_em_j)


def gnn_attention(x2d, lin_w, att_i_bd, att_j_bdT, ei, ej, mask_bias,
                  *, batch, nodes, heads, out_dim):
    BN, F = x2d.shape
    HD = heads * out_dim
    kern = functools.partial(_attn_kernel, heads=heads, out_dim=out_dim)
    flops = (2 * BN * F * HD + 4 * BN * HD * heads
             + 2 * batch * heads * nodes * nodes * out_dim
             + 8 * batch * heads * nodes * nodes)
    ce = pl.CostEstimate(
        flops=int(flops),
        transcendentals=int(batch * heads * nodes * nodes),
        bytes_accessed=int(4 * (BN * F + BN * HD + nodes * nodes + HD * F)))
    return pl.pallas_call(
        kern,
        out_shape=jax.ShapeDtypeStruct((BN, HD), jnp.float32),
        grid=(batch,),
        in_specs=[
            pl.BlockSpec((nodes, F), lambda b: (b, 0)),       # per-batch rows of x
            pl.BlockSpec((HD, F), lambda b: (0, 0)),          # weights stay VMEM-resident
            pl.BlockSpec((HD, heads), lambda b: (0, 0)),
            pl.BlockSpec((heads, HD), lambda b: (0, 0)),
            pl.BlockSpec((nodes, heads), lambda b: (0, 0)),
            pl.BlockSpec((heads, nodes), lambda b: (0, 0)),
            # NOTE: for large N pass the mask as int8 / rebuild it from topk
            # indices via scalar prefetch to shrink the (N, N) footprint.
            pl.BlockSpec((nodes, nodes), lambda b: (0, 0)),
        ],
        out_specs=pl.BlockSpec((nodes, HD), lambda b: (b, 0)),
        compiler_params=pltpu.CompilerParams(
            dimension_semantics=("parallel",),
            vmem_limit_bytes=_VMEM_LIMIT),
        cost_estimate=ce,
    )(x2d, lin_w, att_i_bd, att_j_bdT, ei, ej, mask_bias)


def gdn_tail(gcn, ff_w, ff_b_eff, bn1_g, bn1_b, emb, bn2_g, bn2_b, out_w, out_b,
             *, batch, nodes):
    BN, HD = gcn.shape
    D = ff_w.shape[0]
    OW = out_w.shape[0]
    kern = functools.partial(_tail_kernel, batch=batch, nodes=nodes)
    return pl.pallas_call(
        kern,
        out_shape=jax.ShapeDtypeStruct((BN, OW), jnp.float32),
        grid=(1,),
        in_specs=[_full_spec((BN, HD)), _full_spec((D, HD)), _full_spec((1, D)),
                  _full_spec((1, D)), _full_spec((1, D)), _full_spec((nodes, D)),
                  _full_spec((1, D)), _full_spec((1, D)),
                  _full_spec((OW, D)), _full_spec((1, OW))],
        out_specs=_full_spec((BN, OW)),
        compiler_params=_CP_SEQ,
    )(gcn, ff_w, ff_b_eff.reshape(1, D), bn1_g.reshape(1, D), bn1_b.reshape(1, D),
      emb, bn2_g.reshape(1, D), bn2_b.reshape(1, D), out_w, out_b.reshape(1, OW))


# ---------------------------------------------------------------- forward ----
def gdn_forward(x, params, topk):
    B, N, F = x.shape
    emb = params["emb"]
    H, D = params["att_i"].shape
    HD = H * D
    OW = params["out_w"].shape[0]

    # learned graph + batch-invariant embedding score terms (Pallas, one call)
    cos, ei, ej = learned_graph(emb, params["att_em_i"], params["att_em_j"])
    _, topk_idx = jax.lax.top_k(cos, topk)
    adj = jnp.zeros((N, N), jnp.bool_).at[jnp.arange(N)[:, None], topk_idx].set(True)
    # remove_self_loops + add_self_loops  ==  (topk(i) \ {i}) ∪ {i}
    mask = adj | jnp.eye(N, dtype=jnp.bool_)
    mask_bias = jnp.where(mask, 0.0, _NEG).astype(jnp.float32)   # additive bias

    # block-diagonal per-head attention vectors -> one stacked in-kernel matmul
    eye = jnp.eye(H, dtype=jnp.float32)
    att_i_bd = (params["att_i"][:, :, None] * eye[:, None, :]).reshape(HD, H)
    att_j_bdT = (eye[:, :, None] * params["att_j"][None, :, :]).reshape(H, HD)

    # GraphLayer: fused projection + masked attention (Pallas, parallel over B)
    gcn = gnn_attention(x.reshape(B * N, F), params["lin_w"],
                        att_i_bd, att_j_bdT, ei, ej, mask_bias,
                        batch=B, nodes=N, heads=H, out_dim=D)

    # gnn_b folded into the GNNLayer ff bias (algebraically exact)
    ff_b_eff = params["ff_b"] + params["ff_w"] @ params["gnn_b"]

    # fused GNNLayer tail + GDN tail (Pallas, single call, no HBM round trip)
    out = gdn_tail(gcn, params["ff_w"], ff_b_eff, params["bn1_g"], params["bn1_b"],
                   emb, params["bn2_g"], params["bn2_b"],
                   params["out_w"], params["out_b"], batch=B, nodes=N)
    return out.reshape(B, N, OW)


# ------------------------------------------------------ pure-JAX reference ---
def gdn_forward_ref(x, params, topk):
    B, N, F = x.shape
    emb = params["emb"]
    H, D = params["att_i"].shape
    w = emb
    g = w @ w.T
    n = jnp.sqrt(jnp.sum(w * w, -1, keepdims=True))
    cos = g / (n * n.T)
    _, tk = jax.lax.top_k(cos, topk)
    adj = jnp.zeros((N, N), jnp.bool_).at[jnp.arange(N)[:, None], tk].set(True)
    mask = adj | jnp.eye(N, dtype=jnp.bool_)

    x_lin = jnp.einsum("bnf,kf->bnk", x, params["lin_w"]).reshape(B, N, H, D)
    s_t = (jnp.einsum("bnhd,hd->bnh", x_lin, params["att_i"])
           + jnp.einsum("nd,hd->nh", emb, params["att_em_i"])[None])
    s_s = (jnp.einsum("bnhd,hd->bnh", x_lin, params["att_j"])
           + jnp.einsum("nd,hd->nh", emb, params["att_em_j"])[None])
    sc = s_t[:, :, None, :] + s_s[:, None, :, :]
    sc = jnp.where(sc > 0, sc, 0.2 * sc)
    sc = jnp.where(mask[None, :, :, None], sc, _NEG)
    sc = sc - jnp.max(sc, axis=2, keepdims=True)
    e = jnp.exp(sc)
    p = e / jnp.sum(e, axis=2, keepdims=True)
    gcn = jnp.einsum("bijh,bjhd->bihd", p, x_lin).reshape(B * N, H * D) + params["gnn_b"]

    y = gcn @ params["ff_w"].T + params["ff_b"]
    mean = y.mean(0); var = ((y - mean) ** 2).mean(0)
    y = jnp.maximum((y - mean) / jnp.sqrt(var + _EPS) * params["bn1_g"] + params["bn1_b"], 0.0)

    t = (y.reshape(B, N, D) * emb[None]).reshape(B * N, D)
    mean = t.mean(0); var = ((t - mean) ** 2).mean(0)
    t = jnp.maximum((t - mean) / jnp.sqrt(var + _EPS) * params["bn2_g"] + params["bn2_b"], 0.0)
    o = t @ params["out_w"].T + params["out_b"]
    return o.reshape(B, N, params["out_w"].shape[0])


# ------------------------------------------------------------------ params ---
def init_params(key, node_num, input_dim, dim, heads, out_win):
    ks = jax.random.split(key, 10)
    u = lambda k, shape, b: jax.random.uniform(k, shape, jnp.float32, -b, b)
    return dict(
        emb=u(ks[0], (node_num, dim), 1.0 / math.sqrt(dim)),          # kaiming_uniform(a=sqrt(5))
        lin_w=u(ks[1], (heads * dim, input_dim), 1.0 / math.sqrt(input_dim)),
        att_i=u(ks[2], (heads, dim), 0.5),
        att_j=u(ks[3], (heads, dim), 0.5),
        att_em_i=u(ks[4], (heads, dim), 0.5),
        att_em_j=u(ks[5], (heads, dim), 0.5),
        gnn_b=u(ks[6], (heads * dim,), 0.1),
        ff_w=u(ks[7], (dim, heads * dim), 1.0 / math.sqrt(heads * dim)),
        ff_b=u(ks[8], (dim,), 1.0 / math.sqrt(heads * dim)),
        bn1_g=jnp.ones((dim,), jnp.float32),
        bn1_b=jnp.zeros((dim,), jnp.float32),
        bn2_g=jnp.ones((dim,), jnp.float32),
        bn2_b=jnp.zeros((dim,), jnp.float32),
        out_w=u(ks[9], (out_win, dim), 1.0 / math.sqrt(dim)),
        out_b=jnp.zeros((out_win,), jnp.float32),
    )


if __name__ == "__main__":
    # small shapes consistent with GDN(data) where data is (batch, node_num, input_dim)
    B, N, F = 2, 16, 10            # batch, node_num, input_dim (sliding window)
    D, H, TOPK, OW = 8, 4, 4, 12   # dim, heads, topk, out_window (out_layer_num=1)

    key = jax.random.PRNGKey(0)
    kx, kp = jax.random.split(key)
    params = init_params(kp, N, F, D, H, OW)
    x = jax.random.normal(kx, (B, N, F), jnp.float32)

    out = gdn_forward(x, params, TOPK)
    out = jax.block_until_ready(out)

    ref = gdn_forward_ref(x, params, TOPK)
    assert out.shape == (B, N, OW)
    assert bool(jnp.all(jnp.isfinite(out)))
    max_err = float(jnp.max(jnp.abs(out - ref)))
    assert max_err < 5e-3, f"mismatch vs JAX reference: {max_err}"
    print("KERNEL_OK")
</pallas_src>

<mosaic_0001>
module attributes {stable_mosaic.version = 11 : i64} {
  func.func @_graph_kernel(%arg0: i32, %arg1: memref<16x8xf32, #tpu.memory_space<vmem>>, %arg2: memref<4x8xf32, #tpu.memory_space<vmem>>, %arg3: memref<4x8xf32, #tpu.memory_space<vmem>>, %arg4: memref<16x16xf32, #tpu.memory_space<vmem>>, %arg5: memref<16x4xf32, #tpu.memory_space<vmem>>, %arg6: memref<4x16xf32, #tpu.memory_space<vmem>>) attributes {dimension_semantics = [#tpu.dimension_semantics<arbitrary>], iteration_bounds = array<i64: 1>, scalar_prefetch = 0 : i64, scratch_operands = 0 : i64, tpu.core_type = #tpu.core_type<tc>, window_params = [{pipeline_mode = #tpu.pipeline_mode<synchronous>, transform_indices = @transform_0, window_bounds = array<i64: 16, 8>}, {pipeline_mode = #tpu.pipeline_mode<synchronous>, transform_indices = @transform_1, window_bounds = array<i64: 4, 8>}, {pipeline_mode = #tpu.pipeline_mode<synchronous>, transform_indices = @transform_2, window_bounds = array<i64: 4, 8>}, {pipeline_mode = #tpu.pipeline_mode<synchronous>, transform_indices = @transform_3, window_bounds = array<i64: 16, 16>}, {pipeline_mode = #tpu.pipeline_mode<synchronous>, transform_indices = @transform_4, window_bounds = array<i64: 16, 4>}, {pipeline_mode = #tpu.pipeline_mode<synchronous>, transform_indices = @transform_5, window_bounds = array<i64: 4, 16>}]} {
    %c0 = arith.constant 0 : index
    %c0_0 = arith.constant 0 : index
    %0 = vector.load %arg1[%c0, %c0_0] : memref<16x8xf32, #tpu.memory_space<vmem>>, vector<16x8xf32>
    %1 = arith.mulf %0, %0 : vector<16x8xf32>
    %cst = arith.constant dense<0.000000e+00> : vector<16xf32>
    %2 = vector.multi_reduction <add>, %1, %cst [1] : vector<16x8xf32> to vector<16xf32>
    %3 = vector.shape_cast %2 : vector<16xf32> to vector<16x1xf32>
    %cst_1 = arith.constant 9.99999996E-13 : f32
    %4 = vector.broadcast %cst_1 : f32 to vector<16x1xf32>
    %5 = arith.addf %3, %4 : vector<16x1xf32>
    %6 = math.rsqrt %5 : vector<16x1xf32>
    %7 = vector.broadcast %6 : vector<16x1xf32> to vector<16x8xf32>
    %8 = arith.mulf %0, %7 : vector<16x8xf32>
    %cst_2 = arith.constant dense<0.000000e+00> : vector<16x16xf32>
    %9 = tpu.matmul %8, %8, %cst_2 {dimension_numbers = #tpu.dot_dimension_numbers<[1], [1], [0], [0], [0, 0, 1, 0], [], []>} : vector<16x8xf32>, vector<16x8xf32>, vector<16x16xf32> -> vector<16x16xf32>
    %c0_3 = arith.constant 0 : index
    %c0_4 = arith.constant 0 : index
    %10 = vector.load %arg4[%c0_3, %c0_4] : memref<16x16xf32, #tpu.memory_space<vmem>>, vector<16x16xf32>
    tpu.vector_store %arg4[%c0_3, %c0_4], %9 {strides = array<i32>} : memref<16x16xf32, #tpu.memory_space<vmem>>, vector<16x16xf32>,
    %c0_5 = arith.constant 0 : index
    %c0_6 = arith.constant 0 : index
    %11 = vector.load %arg2[%c0_5, %c0_6] : memref<4x8xf32, #tpu.memory_space<vmem>>, vector<4x8xf32>
    %cst_7 = arith.constant dense<0.000000e+00> : vector<16x4xf32>
    %12 = tpu.matmul %0, %11, %cst_7 {dimension_numbers = #tpu.dot_dimension_numbers<[1], [1], [0], [0], [0, 0, 1, 0], [], []>} : vector<16x8xf32>, vector<4x8xf32>, vector<16x4xf32> -> vector<16x4xf32>
    %c0_8 = arith.constant 0 : index
    %c0_9 = arith.constant 0 : index
    %13 = vector.load %arg5[%c0_8, %c0_9] : memref<16x4xf32, #tpu.memory_space<vmem>>, vector<16x4xf32>
    tpu.vector_store %arg5[%c0_8, %c0_9], %12 {strides = array<i32>} : memref<16x4xf32, #tpu.memory_space<vmem>>, vector<16x4xf32>,
    %c0_10 = arith.constant 0 : index
    %c0_11 = arith.constant 0 : index
    %14 = vector.load %arg3[%c0_10, %c0_11] : memref<4x8xf32, #tpu.memory_space<vmem>>, vector<4x8xf32>
    %cst_12 = arith.constant dense<0.000000e+00> : vector<4x16xf32>
    %15 = tpu.matmul %14, %0, %cst_12 {dimension_numbers = #tpu.dot_dimension_numbers<[1], [1], [0], [0], [0, 0, 1, 0], [], []>} : vector<4x8xf32>, vector<16x8xf32>, vector<4x16xf32> -> vector<4x16xf32>
    %c0_13 = arith.constant 0 : index
    %c0_14 = arith.constant 0 : index
    %16 = vector.load %arg6[%c0_13, %c0_14] : memref<4x16xf32, #tpu.memory_space<vmem>>, vector<4x16xf32>
    tpu.vector_store %arg6[%c0_13, %c0_14], %15 {strides = array<i32>} : memref<4x16xf32, #tpu.memory_space<vmem>>, vector<4x16xf32>,
    return
  }
  func.func @transform_0(%arg0: i32) -> (i32, i32) {
    %c0_i32 = arith.constant 0 : i32
    %c0_i32_0 = arith.constant 0 : i32
    %c0_i32_1 = arith.constant 0 : i32
    return %c0_i32, %c0_i32_0 : i32, i32
  }
  func.func @transform_1(%arg0: i32) -> (i32, i32) {
    %c0_i32 = arith.constant 0 : i32
    %c0_i32_0 = arith.constant 0 : i32
    %c0_i32_1 = arith.constant 0 : i32
    return %c0_i32, %c0_i32_0 : i32, i32
  }
  func.func @transform_2(%arg0: i32) -> (i32, i32) {
    %c0_i32 = arith.constant 0 : i32
    %c0_i32_0 = arith.constant 0 : i32
    %c0_i32_1 = arith.constant 0 : i32
    return %c0_i32, %c0_i32_0 : i32, i32
  }
  func.func @transform_3(%arg0: i32) -> (i32, i32) {
    %c0_i32 = arith.constant 0 : i32
    %c0_i32_0 = arith.constant 0 : i32
    %c0_i32_1 = arith.constant 0 : i32
    return %c0_i32, %c0_i32_0 : i32, i32
  }
  func.func @transform_4(%arg0: i32) -> (i32, i32) {
    %c0_i32 = arith.constant 0 : i32
    %c0_i32_0 = arith.constant 0 : i32
    %c0_i32_1 = arith.constant 0 : i32
    return %c0_i32, %c0_i32_0 : i32, i32
  }
  func.func @transform_5(%arg0: i32) -> (i32, i32) {
    %c0_i32 = arith.constant 0 : i32
    %c0_i32_0 = arith.constant 0 : i32
    %c0_i32_1 = arith.constant 0 : i32
    return %c0_i32, %c0_i32_0 : i32, i32
  }
}

</mosaic_0001>

<llo_original>
// kernel: tpu_custom_call.1
$region0: #{tpu_custom_call.1}
  #allocation0 [shape = 'u32[]', space=smem, size = 0x4, offset = 0x4, fixed_abs, tag = 'smem constant byte address 0x4 - core index']
  #allocation1 [shape = 'u32[72,128]{1,0:T(1,128)}', space=vmem, size = 0x9000, scoped, tag = 'internal scratch']
  %s0 = inlined_call_operand.vmem [shape: f32[16,8], index: 0, kind: input, shape index: {}]
  %s1 = inlined_call_operand.vmem [shape: f32[4,8], index: 1, kind: input, shape index: {}]
  %s2 = inlined_call_operand.vmem [shape: f32[4,8], index: 2, kind: input, shape index: {}]
  %s3 = inlined_call_operand.hbm [shape: f32[16,16], index: 3, kind: output, shape index: {0}]
  %s4 = inlined_call_operand.vmem [shape: f32[16,4], index: 4, kind: output, shape index: {1}]
  %s5 = inlined_call_operand.hbm [shape: f32[4,16], index: 5, kind: output, shape index: {2}]
  %6 = xla_tuple %s3, %s4, %s5
  %s7 = sld [smem:[#allocation0]]
  $region38: #{tpu_custom_call.1} parent=0
    _
  %s9 = ssub.s32 1, %s7
  %s10 = scalar_select 0, %s9, %s7
  $region1: #{tpu_custom_call.1} parent=0
    #allocation2 [shape = 'u8[8192]{0}', space=vmem, size = 0x2000, scoped, tag = 'output window, operand 0, single buffered']
    #allocation3 [shape = 's32[1]{0}', space=sflag, size = 0x4, scoped, tag = 'scoped memory for tpu_custom_call.1']
    #allocation4 [shape = 'u8[2048]{0}', space=vmem, size = 0x800, scoped, tag = 'output window, operand 2, single buffered']
    #allocation5 [shape = 's32[1]{0}', space=sflag, size = 0x4, scoped, tag = 'scoped memory for tpu_custom_call.1']
    %11 = vsyncpa [#allocation3], 0
    %12 = vsyncpa [#allocation5], 0
    // Predicated region
    $region2: #{tpu_custom_call.1} parent=1 // pred_check
      _
    $region3: #{tpu_custom_call.1} parent=1 // pred_check_branch
      %14 = sbr.rel (0) target = $region5
    $region4: #{tpu_custom_call.1} parent=1 // pred_region
      _
    $region5: #{tpu_custom_call.1} parent=1 // pred_fallthru
      _
    // Predicated region
    $region6: #{tpu_custom_call.1} parent=1 // pred_check
      _
    $region7: #{tpu_custom_call.1} parent=1 // pred_check_branch
      %16 = sbr.rel (0) target = $region9
    $region8: #{tpu_custom_call.1} parent=1 // pred_region
      _
    $region9: #{tpu_custom_call.1} parent=1 // pred_fallthru
      _
    // Predicated region
    $region10: #{tpu_custom_call.1} parent=1 // pred_check
      _
    $region11: #{tpu_custom_call.1} parent=1 // pred_check_branch
      %18 = sbr.rel (0) target = $region13
    $region12: #{tpu_custom_call.1} parent=1 // pred_region
      _
    $region13: #{tpu_custom_call.1} parent=1 // pred_fallthru
      _
    %v19 = vld [vmem:[%s0] sm:$0xff]
    %v20 = vld [vmem:[%s0 + $0x8] sm:$0xff]
    %v21 = vmul.f32 %v19, %v19
    %v22 = vmul.f32 %v20, %v20
    %vm23 = vcmask 64512
    %v24 = vsel %vm23, %v21, 0.0
    %25 = vadd.xlane.f32.xlu0 %v24
    %v26 = vpop.xlane.xlu0 %25
    %v27 = vsel %vm23, %v22, 0.0
    %28 = vadd.xlane.f32.xlu0 %v27
    %v29 = vpop.xlane.xlu0 %28
    %v30 = vadd.f32 %v26, 1e-12
    %v31 = vadd.f32 %v29, 1e-12
    %v32 = vrsqrt.pop %v30
    %v33 = vmul.f32 %v32, %v30
    %v34 = vmul.f32 %v33, %v32
    %v35 = vmul.f32 0.5, %v34
    %v36 = vsub.f32 1.5, %v35
    %v37 = vmul.f32 %v32, %v36
    %vm38 = vweird.f32 %v30
    %vm39 = vweird.f32 %v32
    %vm40 = vmor %vm38, %vm39
    %v41 = vsel %vm40, %v32, %v37
    %v42 = vrsqrt.pop %v31
    %v43 = vmul.f32 %v42, %v31
    %v44 = vmul.f32 %v43, %v42
    %v45 = vmul.f32 0.5, %v44
    %v46 = vsub.f32 1.5, %v45
    %v47 = vmul.f32 %v42, %v46
    %vm48 = vweird.f32 %v31
    %vm49 = vweird.f32 %v42
    %vm50 = vmor %vm48, %vm49
    %v51 = vsel %vm50, %v42, %v47
    %v52 = vmul.f32 %v19, %v41
    %v53 = vmul.f32 %v20, %v51
    %v55 = vsel %vm23, %v52, 0
    %v58 = vsel %vm23, %v53, 0
    %60 = vmatpush.xpose.msra.mxu0 0.0
    %61 = vmatpush.xpose.msra.mxu0 0.0
    %62 = vmatpush.xpose.msra.mxu0 0.0
    %63 = vmatpush.xpose.msra.mxu0 0.0
    %64 = vmatpush.xpose.msra.mxu0 0.0
    %65 = vmatpush.xpose.msra.mxu0 0.0
    %66 = vmatpush.xpose.msra.mxu0 0.0
    %67 = vmatpush.xpose.msra.mxu0 0.0
    %68 = vmatpush.xpose.msra.mxu0 0.0
    %69 = vmatpush.xpose.msra.mxu0 0.0
    %70 = vmatpush.xpose.msra.mxu0 0.0
    %71 = vmatpush.xpose.msra.mxu0 0.0
    %72 = vmatpush.xpose.msra.mxu0 0.0
    %73 = vmatpush.xpose.msra.mxu0 0.0
    %74 = vmatpush.xpose.msra.mxu0 %v58
    %75 = vmatpush.xpose.msra.mxu0 %v55
    %76 = vmatmul.f32.gmra.mxu0 %v55
    %v77 = vpop.f32.mrf.mxu0
    %v78 = vadd.f32 0.0, %v77
    %79 = vmatmul.f32.gmra.mxu0 %v58
    %v80 = vpop.f32.mrf.mxu0
    %v81 = vadd.f32 0.0, %v80
    %82 = vdwg.mxu0
    %vm83 = vcmask 130048
    %84 = vst.msk [vmem:[#allocation2] sm:$0xff] %vm83, %v78
    %85 = vst.msk [vmem:[#allocation2 + $0x8] sm:$0xff] %vm83, %v81
    %v86 = vld [vmem:[%s1] sm:$0xf]
    %v88 = vsel %vm23, %v19, 0
    %v91 = vsel %vm23, %v20, 0
    %v94 = vsel %vm23, %v86, 0
    %96 = vmatpush.xpose.msra.mxu0 0.0
    %97 = vmatpush.xpose.msra.mxu0 0.0
    %98 = vmatpush.xpose.msra.mxu0 0.0
    %99 = vmatpush.xpose.msra.mxu0 0.0
    %100 = vmatpush.xpose.msra.mxu0 0.0
    %101 = vmatpush.xpose.msra.mxu0 0.0
    %102 = vmatpush.xpose.msra.mxu0 0.0
    %103 = vmatpush.xpose.msra.mxu0 0.0
    %104 = vmatpush.xpose.msra.mxu0 0.0
    %105 = vmatpush.xpose.msra.mxu0 0.0
    %106 = vmatpush.xpose.msra.mxu0 0.0
    %107 = vmatpush.xpose.msra.mxu0 0.0
    %108 = vmatpush.xpose.msra.mxu0 0.0
    %109 = vmatpush.xpose.msra.mxu0 0.0
    %110 = vmatpush.xpose.msra.mxu0 0.0
    %111 = vmatpush.xpose.msra.mxu0 %v94
    %112 = vmatmul.f32.gmra.mxu0 %v88
    %v113 = vpop.f32.mrf.mxu0
    %v114 = vadd.f32 0.0, %v113
    %115 = vmatmul.f32.gmra.mxu0 %v91
    %v116 = vpop.f32.mrf.mxu0
    %v117 = vadd.f32 0.0, %v116
    %118 = vdwg.mxu0
    %vm119 = vcmask 31744
    %120 = vst.msk [vmem:[%s4] sm:$0xff] %vm119, %v114
    %121 = vst.msk [vmem:[%s4 + $0x8] sm:$0xff] %vm119, %v117
    %v122 = vld [vmem:[%s2] sm:$0xf]
    %v124 = vsel %vm23, %v122, 0
    %126 = vmatpush.xpose.msra.mxu0 0.0
    %127 = vmatpush.xpose.msra.mxu0 0.0
    %128 = vmatpush.xpose.msra.mxu0 0.0
    %129 = vmatpush.xpose.msra.mxu0 0.0
    %130 = vmatpush.xpose.msra.mxu0 0.0
    %131 = vmatpush.xpose.msra.mxu0 0.0
    %132 = vmatpush.xpose.msra.mxu0 0.0
    %133 = vmatpush.xpose.msra.mxu0 0.0
    %134 = vmatpush.xpose.msra.mxu0 0.0
    %135 = vmatpush.xpose.msra.mxu0 0.0
    %136 = vmatpush.xpose.msra.mxu0 0.0
    %137 = vmatpush.xpose.msra.mxu0 0.0
    %138 = vmatpush.xpose.msra.mxu0 0.0
    %139 = vmatpush.xpose.msra.mxu0 0.0
    %140 = vmatpush.xpose.msra.mxu0 %v91
    %141 = vmatpush.xpose.msra.mxu0 %v88
    %142 = vmatmul.f32.gmra.mxu0 %v124
    %v143 = vpop.f32.mrf.mxu0
    %v144 = vadd.f32 0.0, %v143
    %145 = vdwg.mxu0
    %vm146 = vcmask 125952
    %147 = vst.msk [vmem:[#allocation4] sm:$0xf] %vm146, %v144
    // Predicated region
    $region14: #{tpu_custom_call.1} parent=1 // pred_check
      _
    $region15: #{tpu_custom_call.1} parent=1 // pred_check_branch
      %149 = sbr.rel (0) target = $region17
    $region16: #{tpu_custom_call.1} parent=1 // pred_region
      %151 = vsyncadd [#allocation3], 0
      %s152 = sshll.u32 [#allocation2], 4
      %s153 = int_to_ptr.vmem [resolvable:$true] %s152
      %s154 = sshll.u32 %s3, 4
      %s155 = int_to_ptr.hbm [resolvable:$true] %s154
      %160 = dma.vmem_to_hbm [thread:$0]  %s153, 256, %s155, [#allocation3], 128, 128, 8
    $region17: #{tpu_custom_call.1} parent=1 // pred_fallthru
      _
    // Predicated region
    $region18: #{tpu_custom_call.1} parent=1 // pred_check
      _
    $region19: #{tpu_custom_call.1} parent=1 // pred_check_branch
      %162 = sbr.rel (0) target = $region21
    $region20: #{tpu_custom_call.1} parent=1 // pred_region
      _
    $region21: #{tpu_custom_call.1} parent=1 // pred_fallthru
      _
    // Predicated region
    $region22: #{tpu_custom_call.1} parent=1 // pred_check
      _
    $region23: #{tpu_custom_call.1} parent=1 // pred_check_branch
      %164 = sbr.rel (0) target = $region25
    $region24: #{tpu_custom_call.1} parent=1 // pred_region
      %166 = vsyncadd [#allocation5], 0
      %s168 = sshll.u32 [#allocation4], 4
      %s169 = int_to_ptr.vmem [resolvable:$true] %s168
      %s170 = sshll.u32 %s5, 4
      %s171 = int_to_ptr.hbm [resolvable:$true] %s170
      %173 = dma.vmem_to_hbm [thread:$0]  %s169, 64, %s171, [#allocation5]
    $region25: #{tpu_custom_call.1} parent=1 // pred_fallthru
      _
    // Predicated region
    $region26: #{tpu_custom_call.1} parent=1 // pred_check
      _
    $region27: #{tpu_custom_call.1} parent=1 // pred_check_branch
      %175 = sbr.rel (0) target = $region29
    $region28: #{tpu_custom_call.1} parent=1 // pred_region
      %177 = dma.done [#allocation3], 256
    $region29: #{tpu_custom_call.1} parent=1 // pred_fallthru
      _
    // Predicated region
    $region30: #{tpu_custom_call.1} parent=1 // pred_check
      _
    $region31: #{tpu_custom_call.1} parent=1 // pred_check_branch
      %179 = sbr.rel (0) target = $region33
    $region32: #{tpu_custom_call.1} parent=1 // pred_region
      _
    $region33: #{tpu_custom_call.1} parent=1 // pred_fallthru
      _
    // Predicated region
    $region34: #{tpu_custom_call.1} parent=1 // pred_check
      _
    $region35: #{tpu_custom_call.1} parent=1 // pred_check_branch
      %181 = sbr.rel (0) target = $region37
    $region36: #{tpu_custom_call.1} parent=1 // pred_region
      %183 = dma.done [#allocation5], 64
    $region37: #{tpu_custom_call.1} parent=1 // pred_fallthru
      _
    %184 = vsyncpa [#allocation3], 1
    %185 = vsyncpa [#allocation5], 1

</llo_original>
